<compile_context>
chip_gen: v7x
topology: tpu7x:2x2x1
jax: 0.10.0
libtpu: 0.0.40
codegen_flags: <defaults>
</compile_context>

<pallas_src>
import jax
import jax.numpy as jnp
from jax.experimental import pallas as pl
from jax.experimental.pallas import tpu as pltpu

_EPS = 1e-6


def _grad_soft_l1_kernel(x_ref, y_ref, part_h_ref, part_w_ref):
    x = x_ref[...].astype(jnp.float32)   # (tb, H, W)
    y = y_ref[...].astype(jnp.float32)   # (tb, H, W)

    # Shared difference: (gx - gy) == grad(x - y), so diff once.
    e = x - y

    # H-gradient and W-gradient Charbonnier partial sums for this block.
    # (slice-based diffs kept for lowering robustness; a pltpu.roll+mask
    #  variant would keep operands (8,128)-aligned but is optional here —
    #  the kernel is HBM-bound.)
    dh = e[:, 1:, :] - e[:, :-1, :]
    dw = e[:, :, 1:] - e[:, :, :-1]
    s_h = jnp.sum(jnp.sqrt(dh * dh + _EPS))
    s_w = jnp.sum(jnp.sqrt(dw * dw + _EPS))

    # Lane-dense full-vreg stores of the per-block partials (each grid index
    # owns its own output block, so the grid axis can be "parallel").
    part_h_ref[...] = jnp.full(part_h_ref.shape, s_h, dtype=jnp.float32)
    part_w_ref[...] = jnp.full(part_w_ref.shape, s_w, dtype=jnp.float32)


def _choose_block_bc(bc, h, w, itemsize):
    """Largest divisor of bc whose (block_bc, H, W) block fits the VMEM budget.

    Budget per-input block at ~2 MiB: 2 inputs x 2 pipeline buffers = ~8 MiB
    of streamed data plus f32 intermediates stays well inside the scoped VMEM
    default on v5e/v6e and inside v7x's 64 MiB physical VMEM, while blocks
    stay large enough to amortize the ~0.35 us/step grid overhead.
    """
    bytes_per_plane = h * w * max(int(itemsize), 4)  # f32 intermediates
    target_block_bytes = 2 * 1024 * 1024
    cap = max(1, target_block_bytes // bytes_per_plane)
    cap = min(cap, bc)
    for b in range(int(cap), 0, -1):
        if bc % b == 0:
            return b
    return 1


def grad_soft_l1(y_input, y_target, *, block_bc=None):
    """Pallas implementation of GradSoftL1.forward for NCHW inputs."""
    assert y_input.shape == y_target.shape
    B, C, H, W = y_input.shape
    BC = B * C
    x = y_input.reshape(BC, H, W)
    y = y_target.reshape(BC, H, W)

    if block_bc is None:
        block_bc = _choose_block_bc(BC, H, W, jnp.dtype(x.dtype).itemsize)
    assert BC % block_bc == 0
    num_blocks = BC // block_bc
    grid = (num_blocks,)

    cost = pl.CostEstimate(
        flops=6 * BC * H * W,
        transcendentals=2 * BC * H * W,
        bytes_accessed=2 * BC * H * W * int(jnp.dtype(x.dtype).itemsize),
    )

    part_h, part_w = pl.pallas_call(
        _grad_soft_l1_kernel,
        out_shape=(
            jax.ShapeDtypeStruct((num_blocks, 8, 128), jnp.float32),
            jax.ShapeDtypeStruct((num_blocks, 8, 128), jnp.float32),
        ),
        grid_spec=pltpu.PrefetchScalarGridSpec(
            num_scalar_prefetch=0,
            grid=grid,
            in_specs=[
                pl.BlockSpec((block_bc, H, W), lambda i: (i, 0, 0)),
                pl.BlockSpec((block_bc, H, W), lambda i: (i, 0, 0)),
            ],
            out_specs=[
                pl.BlockSpec((1, 8, 128), lambda i: (i, 0, 0)),
                pl.BlockSpec((1, 8, 128), lambda i: (i, 0, 0)),
            ],
        ),
        compiler_params=pltpu.CompilerParams(
            dimension_semantics=("parallel",),   # independent blocks: 2x TCs on v7x
            vmem_limit_bytes=48 * 1024 * 1024,
        ),
        cost_estimate=cost,
    )(x, y)

    # Tiny final reduction + mean normalisation in the wrapper.
    sum_h = jnp.sum(part_h[:, 0, 0])
    sum_w = jnp.sum(part_w[:, 0, 0])
    n_h = BC * (H - 1) * W   # number of elements in the H-gradient tensors
    n_w = BC * H * (W - 1)   # number of elements in the W-gradient tensors
    h_loss = sum_h / jnp.float32(n_h)
    w_loss = sum_w / jnp.float32(n_w)
    return (h_loss + w_loss) / 2.0


def _reference(y_input, y_target):
    """Pure-JAX reference mirroring the PyTorch module."""
    def charbonnier(a, b):
        d = a - b
        return jnp.mean(jnp.sqrt(d * d + _EPS))

    ig_h = y_input[..., 1:, :] - y_input[..., :-1, :]
    ig_w = y_input[..., :, 1:] - y_input[..., :, :-1]
    tg_h = y_target[..., 1:, :] - y_target[..., :-1, :]
    tg_w = y_target[..., :, 1:] - y_target[..., :, :-1]
    return (charbonnier(ig_h, tg_h) + charbonnier(ig_w, tg_w)) / 2.0


if __name__ == "__main__":
    key = jax.random.PRNGKey(0)
    k1, k2 = jax.random.split(key)
    B, C, H, W = 2, 4, 16, 16
    y_input = jax.random.normal(k1, (B, C, H, W), dtype=jnp.float32)
    y_target = jax.random.normal(k2, (B, C, H, W), dtype=jnp.float32)

    loss = grad_soft_l1(y_input, y_target)
    loss = jax.block_until_ready(loss)

    ref = _reference(y_input, y_target)
    assert jnp.allclose(loss, ref, rtol=1e-5, atol=1e-6), (loss, ref)

    print("KERNEL_OK")
</pallas_src>

<mosaic_0001>
module attributes {stable_mosaic.version = 11 : i64} {
  func.func @_grad_soft_l1_kernel(%arg0: i32, %arg1: memref<8x16x16xf32, #tpu.memory_space<vmem>>, %arg2: memref<8x16x16xf32, #tpu.memory_space<vmem>>, %arg3: memref<1x8x128xf32, #tpu.memory_space<vmem>>, %arg4: memref<1x8x128xf32, #tpu.memory_space<vmem>>) attributes {dimension_semantics = [#tpu.dimension_semantics<parallel>], iteration_bounds = array<i64: 1>, scalar_prefetch = 0 : i64, scratch_operands = 0 : i64, tpu.core_type = #tpu.core_type<tc>, window_params = [{transform_indices = @transform_0, window_bounds = array<i64: 8, 16, 16>}, {transform_indices = @transform_1, window_bounds = array<i64: 8, 16, 16>}, {transform_indices = @transform_2, window_bounds = array<i64: 1, 8, 128>}, {transform_indices = @transform_3, window_bounds = array<i64: 1, 8, 128>}]} {
    %c0 = arith.constant 0 : index
    %c0_0 = arith.constant 0 : index
    %c0_1 = arith.constant 0 : index
    %0 = vector.load %arg1[%c0, %c0_0, %c0_1] : memref<8x16x16xf32, #tpu.memory_space<vmem>>, vector<8x16x16xf32>
    %c0_2 = arith.constant 0 : index
    %c0_3 = arith.constant 0 : index
    %c0_4 = arith.constant 0 : index
    %1 = vector.load %arg2[%c0_2, %c0_3, %c0_4] : memref<8x16x16xf32, #tpu.memory_space<vmem>>, vector<8x16x16xf32>
    %2 = arith.subf %0, %1 : vector<8x16x16xf32>
    %3 = vector.extract_strided_slice %2 {offsets = [0, 1, 0], sizes = [8, 15, 16], strides = [1, 1, 1]} : vector<8x16x16xf32> to vector<8x15x16xf32>
    %4 = vector.extract_strided_slice %2 {offsets = [0, 0, 0], sizes = [8, 15, 16], strides = [1, 1, 1]} : vector<8x16x16xf32> to vector<8x15x16xf32>
    %5 = arith.subf %3, %4 : vector<8x15x16xf32>
    %6 = vector.extract_strided_slice %2 {offsets = [0, 0, 1], sizes = [8, 16, 15], strides = [1, 1, 1]} : vector<8x16x16xf32> to vector<8x16x15xf32>
    %7 = vector.extract_strided_slice %2 {offsets = [0, 0, 0], sizes = [8, 16, 15], strides = [1, 1, 1]} : vector<8x16x16xf32> to vector<8x16x15xf32>
    %8 = arith.subf %6, %7 : vector<8x16x15xf32>
    %9 = arith.mulf %5, %5 : vector<8x15x16xf32>
    %cst = arith.constant 9.99999997E-7 : f32
    %10 = vector.broadcast %cst : f32 to vector<8x15x16xf32>
    %11 = arith.addf %9, %10 : vector<8x15x16xf32>
    %12 = math.sqrt %11 : vector<8x15x16xf32>
    %13 = vector.shape_cast %12 : vector<8x15x16xf32> to vector<1x8x15x16xf32>
    %cst_5 = arith.constant dense<0.000000e+00> : vector<1xf32>
    %14 = vector.multi_reduction <add>, %13, %cst_5 [1, 2, 3] : vector<1x8x15x16xf32> to vector<1xf32>
    %15 = vector.shape_cast %14 : vector<1xf32> to vector<1x1x1x1xf32>
    %16 = vector.extract %15[0, 0, 0, 0] : f32 from vector<1x1x1x1xf32>
    %17 = arith.mulf %8, %8 : vector<8x16x15xf32>
    %cst_6 = arith.constant 9.99999997E-7 : f32
    %18 = vector.broadcast %cst_6 : f32 to vector<8x16x15xf32>
    %19 = arith.addf %17, %18 : vector<8x16x15xf32>
    %20 = math.sqrt %19 : vector<8x16x15xf32>
    %21 = vector.shape_cast %20 : vector<8x16x15xf32> to vector<1x8x16x15xf32>
    %cst_7 = arith.constant dense<0.000000e+00> : vector<1xf32>
    %22 = vector.multi_reduction <add>, %21, %cst_7 [1, 2, 3] : vector<1x8x16x15xf32> to vector<1xf32>
    %23 = vector.shape_cast %22 : vector<1xf32> to vector<1x1x1x1xf32>
    %24 = vector.extract %23[0, 0, 0, 0] : f32 from vector<1x1x1x1xf32>
    %25 = vector.broadcast %16 : f32 to vector<1x8x128xf32>
    %c0_8 = arith.constant 0 : index
    %c0_9 = arith.constant 0 : index
    %c0_10 = arith.constant 0 : index
    %26 = vector.load %arg3[%c0_8, %c0_9, %c0_10] : memref<1x8x128xf32, #tpu.memory_space<vmem>>, vector<1x8x128xf32>
    tpu.vector_store %arg3[%c0_8, %c0_9, %c0_10], %25 {strides = array<i32>} : memref<1x8x128xf32, #tpu.memory_space<vmem>>, vector<1x8x128xf32>,
    %27 = vector.broadcast %24 : f32 to vector<1x8x128xf32>
    %c0_11 = arith.constant 0 : index
    %c0_12 = arith.constant 0 : index
    %c0_13 = arith.constant 0 : index
    %28 = vector.load %arg4[%c0_11, %c0_12, %c0_13] : memref<1x8x128xf32, #tpu.memory_space<vmem>>, vector<1x8x128xf32>
    tpu.vector_store %arg4[%c0_11, %c0_12, %c0_13], %27 {strides = array<i32>} : memref<1x8x128xf32, #tpu.memory_space<vmem>>, vector<1x8x128xf32>,
    return
  }
  func.func @transform_0(%arg0: i32) -> (i32, i32, i32) {
    %c0_i32 = arith.constant 0 : i32
    %c0_i32_0 = arith.constant 0 : i32
    %c0_i32_1 = arith.constant 0 : i32
    return %arg0, %c0_i32, %c0_i32_0 : i32, i32, i32
  }
  func.func @transform_1(%arg0: i32) -> (i32, i32, i32) {
    %c0_i32 = arith.constant 0 : i32
    %c0_i32_0 = arith.constant 0 : i32
    %c0_i32_1 = arith.constant 0 : i32
    return %arg0, %c0_i32, %c0_i32_0 : i32, i32, i32
  }
  func.func @transform_2(%arg0: i32) -> (i32, i32, i32) {
    %c0_i32 = arith.constant 0 : i32
    %c0_i32_0 = arith.constant 0 : i32
    %c0_i32_1 = arith.constant 0 : i32
    return %arg0, %c0_i32, %c0_i32_0 : i32, i32, i32
  }
  func.func @transform_3(%arg0: i32) -> (i32, i32, i32) {
    %c0_i32 = arith.constant 0 : i32
    %c0_i32_0 = arith.constant 0 : i32
    %c0_i32_1 = arith.constant 0 : i32
    return %arg0, %c0_i32, %c0_i32_0 : i32, i32, i32
  }
}

</mosaic_0001>

<llo_original>
// kernel: tpu_custom_call.1
$region0: #{tpu_custom_call.1}
  #allocation0 [shape = 'u32[]', space=smem, size = 0x4, offset = 0x4, fixed_abs, tag = 'smem constant byte address 0x4 - core index']
  #allocation1 [shape = 'u32[144,128]{1,0:T(1,128)}', space=vmem, size = 0x12000, scoped, tag = 'internal scratch']
  %s0 = inlined_call_operand.hbm [shape: f32[8,16,16], index: 0, kind: input, shape index: {}]
  %s1 = inlined_call_operand.hbm [shape: f32[8,16,16], index: 1, kind: input, shape index: {}]
  %s2 = inlined_call_operand.hbm [shape: f32[1,8,128], index: 2, kind: output, shape index: {0}]
  %s3 = inlined_call_operand.hbm [shape: f32[1,8,128], index: 3, kind: output, shape index: {1}]
  %4 = xla_tuple %s2, %s3
  %s5 = sld [smem:[#allocation0]]
  $region34: #{tpu_custom_call.1} parent=0
    _
  %s7 = ssub.s32 1, %s5
  %s8 = scalar_select 0, %s7, %s5
  $region1: #{tpu_custom_call.1} parent=0
    #allocation2 [shape = 'u8[65536]{0}', space=vmem, size = 0x10000, scoped, tag = 'input window, operand 0, single buffered']
    #allocation3 [shape = 's32[1]{0}', space=sflag, size = 0x4, scoped, tag = 'scoped memory for tpu_custom_call.1']
    #allocation4 [shape = 's32[1]{0}', space=sflag, size = 0x4, scoped, tag = 'scoped memory for tpu_custom_call.1']
    #allocation5 [shape = 'u8[65536]{0}', space=vmem, size = 0x10000, scoped, tag = 'input window, operand 1, single buffered']
    #allocation6 [shape = 's32[1]{0}', space=sflag, size = 0x4, scoped, tag = 'scoped memory for tpu_custom_call.1']
    #allocation7 [shape = 'u8[4096]{0}', space=vmem, size = 0x1000, scoped, tag = 'output window, operand 0, single buffered']
    #allocation8 [shape = 'u8[4096]{0}', space=vmem, size = 0x1000, scoped, tag = 'output window, operand 1, single buffered']
    #allocation9 [shape = 's32[1]{0}', space=sflag, size = 0x4, scoped, tag = 'scoped memory for tpu_custom_call.1']
    %9 = vsyncpa [#allocation3], 0
    %10 = vsyncpa [#allocation6], 0
    %11 = vsyncpa [#allocation4], 0
    %12 = vsyncpa [#allocation9], 0
    // Predicated region
    $region2: #{tpu_custom_call.1} parent=1 // pred_check
      _
    $region3: #{tpu_custom_call.1} parent=1 // pred_check_branch
      %14 = sbr.rel (0) target = $region5
    $region4: #{tpu_custom_call.1} parent=1 // pred_region
      %s16 = ssub.s32 2048, 2048
      %17 = vsyncadd [#allocation3], %s16
      %s18 = sshll.u32 [#allocation2], 4
      %s19 = int_to_ptr.vmem [resolvable:$true] %s18
      %24 = dma.hbm_to_vmem [thread:$0]  %s0, 2048, %s19, [#allocation3], 128, 128, 8
    $region5: #{tpu_custom_call.1} parent=1 // pred_fallthru
      _
    // Predicated region
    $region6: #{tpu_custom_call.1} parent=1 // pred_check
      _
    $region7: #{tpu_custom_call.1} parent=1 // pred_check_branch
      %26 = sbr.rel (0) target = $region9
    $region8: #{tpu_custom_call.1} parent=1 // pred_region
      %s28 = ssub.s32 2048, 2048
      %29 = vsyncadd [#allocation6], %s28
      %s30 = sshll.u32 [#allocation5], 4
      %s31 = int_to_ptr.vmem [resolvable:$true] %s30
      %36 = dma.hbm_to_vmem [thread:$0]  %s1, 2048, %s31, [#allocation6], 128, 128, 8
    $region9: #{tpu_custom_call.1} parent=1 // pred_fallthru
      _
    // Predicated region
    $region10: #{tpu_custom_call.1} parent=1 // pred_check
      _
    $region11: #{tpu_custom_call.1} parent=1 // pred_check_branch
      %38 = sbr.rel (0) target = $region13
    $region12: #{tpu_custom_call.1} parent=1 // pred_region
      %39 = dma.done [#allocation3], 2048
    $region13: #{tpu_custom_call.1} parent=1 // pred_fallthru
      _
    // Predicated region
    $region14: #{tpu_custom_call.1} parent=1 // pred_check
      _
    $region15: #{tpu_custom_call.1} parent=1 // pred_check_branch
      %41 = sbr.rel (0) target = $region17
    $region16: #{tpu_custom_call.1} parent=1 // pred_region
      %42 = dma.done [#allocation6], 2048
    $region17: #{tpu_custom_call.1} parent=1 // pred_fallthru
      _
    %v43 = vld [vmem:[#allocation2] sm:$0xff]
    %v44 = vld [vmem:[#allocation2 + $0x8] sm:$0xff]
    %v45 = vld [vmem:[#allocation2 + $0x10] sm:$0xff]
    %v46 = vld [vmem:[#allocation2 + $0x18] sm:$0xff]
    %v47 = vld [vmem:[#allocation2 + $0x20] sm:$0xff]
    %v48 = vld [vmem:[#allocation2 + $0x28] sm:$0xff]
    %v49 = vld [vmem:[#allocation2 + $0x30] sm:$0xff]
    %v50 = vld [vmem:[#allocation2 + $0x38] sm:$0xff]
    %v51 = vld [vmem:[#allocation2 + $0x40] sm:$0xff]
    %v52 = vld [vmem:[#allocation2 + $0x48] sm:$0xff]
    %v53 = vld [vmem:[#allocation2 + $0x50] sm:$0xff]
    %v54 = vld [vmem:[#allocation2 + $0x58] sm:$0xff]
    %v55 = vld [vmem:[#allocation2 + $0x60] sm:$0xff]
    %v56 = vld [vmem:[#allocation2 + $0x68] sm:$0xff]
    %v57 = vld [vmem:[#allocation2 + $0x70] sm:$0xff]
    %v58 = vld [vmem:[#allocation2 + $0x78] sm:$0xff]
    %v59 = vld [vmem:[#allocation5] sm:$0xff]
    %v60 = vld [vmem:[#allocation5 + $0x8] sm:$0xff]
    %v61 = vld [vmem:[#allocation5 + $0x10] sm:$0xff]
    %v62 = vld [vmem:[#allocation5 + $0x18] sm:$0xff]
    %v63 = vld [vmem:[#allocation5 + $0x20] sm:$0xff]
    %v64 = vld [vmem:[#allocation5 + $0x28] sm:$0xff]
    %v65 = vld [vmem:[#allocation5 + $0x30] sm:$0xff]
    %v66 = vld [vmem:[#allocation5 + $0x38] sm:$0xff]
    %v67 = vld [vmem:[#allocation5 + $0x40] sm:$0xff]
    %v68 = vld [vmem:[#allocation5 + $0x48] sm:$0xff]
    %v69 = vld [vmem:[#allocation5 + $0x50] sm:$0xff]
    %v70 = vld [vmem:[#allocation5 + $0x58] sm:$0xff]
    %v71 = vld [vmem:[#allocation5 + $0x60] sm:$0xff]
    %v72 = vld [vmem:[#allocation5 + $0x68] sm:$0xff]
    %v73 = vld [vmem:[#allocation5 + $0x70] sm:$0xff]
    %v74 = vld [vmem:[#allocation5 + $0x78] sm:$0xff]
    %v75 = vsub.f32 %v43, %v59
    %v76 = vsub.f32 %v44, %v60
    %v77 = vsub.f32 %v45, %v61
    %v78 = vsub.f32 %v46, %v62
    %v79 = vsub.f32 %v47, %v63
    %v80 = vsub.f32 %v48, %v64
    %v81 = vsub.f32 %v49, %v65
    %v82 = vsub.f32 %v50, %v66
    %v83 = vsub.f32 %v51, %v67
    %v84 = vsub.f32 %v52, %v68
    %v85 = vsub.f32 %v53, %v69
    %v86 = vsub.f32 %v54, %v70
    %v87 = vsub.f32 %v55, %v71
    %v88 = vsub.f32 %v56, %v72
    %v89 = vsub.f32 %v57, %v73
    %v90 = vsub.f32 %v58, %v74
    %vm107 = vcmask 1040384
    %v108 = vrot.slane %v75, 7
    %v109 = vrot.slane %v76, 7
    %v110 = vsel %vm107, %v108, %v109
    %v111 = vrot.slane %v77, 7
    %v112 = vrot.slane %v78, 7
    %v113 = vsel %vm107, %v111, %v112
    %v114 = vrot.slane %v79, 7
    %v115 = vrot.slane %v80, 7
    %v116 = vsel %vm107, %v114, %v115
    %v117 = vrot.slane %v81, 7
    %v118 = vrot.slane %v82, 7
    %v119 = vsel %vm107, %v117, %v118
    %v120 = vrot.slane %v83, 7
    %v121 = vrot.slane %v84, 7
    %v122 = vsel %vm107, %v120, %v121
    %v123 = vrot.slane %v85, 7
    %v124 = vrot.slane %v86, 7
    %v125 = vsel %vm107, %v123, %v124
    %v126 = vrot.slane %v87, 7
    %v127 = vrot.slane %v88, 7
    %v128 = vsel %vm107, %v126, %v127
    %v129 = vrot.slane %v89, 7
    %v130 = vrot.slane %v90, 7
    %v131 = vsel %vm107, %v129, %v130
    %v148 = vsub.f32 %v75, %v108
    %v149 = vsub.f32 %v76, %v110
    %v150 = vsub.f32 %v77, %v111
    %v151 = vsub.f32 %v78, %v113
    %v152 = vsub.f32 %v79, %v114
    %v153 = vsub.f32 %v80, %v116
    %v154 = vsub.f32 %v81, %v117
    %v155 = vsub.f32 %v82, %v119
    %v156 = vsub.f32 %v83, %v120
    %v157 = vsub.f32 %v84, %v122
    %v158 = vsub.f32 %v85, %v123
    %v159 = vsub.f32 %v86, %v125
    %v160 = vsub.f32 %v87, %v126
    %v161 = vsub.f32 %v88, %v128
    %v162 = vsub.f32 %v89, %v129
    %v163 = vsub.f32 %v90, %v131
    %164 = vrot.lane.b32.xlu0 %v75, 1
    %v165 = vpop.permute.xlu0 %164
    %166 = vrot.lane.b32.xlu0 %v76, 1
    %v167 = vpop.permute.xlu0 %166
    %168 = vrot.lane.b32.xlu0 %v77, 1
    %v169 = vpop.permute.xlu0 %168
    %170 = vrot.lane.b32.xlu0 %v78, 1
    %v171 = vpop.permute.xlu0 %170
    %172 = vrot.lane.b32.xlu0 %v79, 1
    %v173 = vpop.permute.xlu0 %172
    %174 = vrot.lane.b32.xlu0 %v80, 1
    %v175 = vpop.permute.xlu0 %174
    %176 = vrot.lane.b32.xlu0 %v81, 1
    %v177 = vpop.permute.xlu0 %176
    %178 = vrot.lane.b32.xlu0 %v82, 1
    %v179 = vpop.permute.xlu0 %178
    %180 = vrot.lane.b32.xlu0 %v83, 1
    %v181 = vpop.permute.xlu0 %180
    %182 = vrot.lane.b32.xlu0 %v84, 1
    %v183 = vpop.permute.xlu0 %182
    %184 = vrot.lane.b32.xlu0 %v85, 1
    %v185 = vpop.permute.xlu0 %184
    %186 = vrot.lane.b32.xlu0 %v86, 1
    %v187 = vpop.permute.xlu0 %186
    %188 = vrot.lane.b32.xlu0 %v87, 1
    %v189 = vpop.permute.xlu0 %188
    %190 = vrot.lane.b32.xlu0 %v88, 1
    %v191 = vpop.permute.xlu0 %190
    %192 = vrot.lane.b32.xlu0 %v89, 1
    %v193 = vpop.permute.xlu0 %192
    %194 = vrot.lane.b32.xlu0 %v90, 1
    %v195 = vpop.permute.xlu0 %194
    %v212 = vsub.f32 %v75, %v165
    %v213 = vsub.f32 %v76, %v167
    %v214 = vsub.f32 %v77, %v169
    %v215 = vsub.f32 %v78, %v171
    %v216 = vsub.f32 %v79, %v173
    %v217 = vsub.f32 %v80, %v175
    %v218 = vsub.f32 %v81, %v177
    %v219 = vsub.f32 %v82, %v179
    %v220 = vsub.f32 %v83, %v181
    %v221 = vsub.f32 %v84, %v183
    %v222 = vsub.f32 %v85, %v185
    %v223 = vsub.f32 %v86, %v187
    %v224 = vsub.f32 %v87, %v189
    %v225 = vsub.f32 %v88, %v191
    %v226 = vsub.f32 %v89, %v193
    %v227 = vsub.f32 %v90, %v195
    %v228 = vmul.f32 %v148, %v148
    %v229 = vmul.f32 %v149, %v149
    %v230 = vmul.f32 %v150, %v150
    %v231 = vmul.f32 %v151, %v151
    %v232 = vmul.f32 %v152, %v152
    %v233 = vmul.f32 %v153, %v153
    %v234 = vmul.f32 %v154, %v154
    %v235 = vmul.f32 %v155, %v155
    %v236 = vmul.f32 %v156, %v156
    %v237 = vmul.f32 %v157, %v157
    %v238 = vmul.f32 %v158, %v158
    %v239 = vmul.f32 %v159, %v159
    %v240 = vmul.f32 %v160, %v160
    %v241 = vmul.f32 %v161, %v161
    %v242 = vmul.f32 %v162, %v162
    %v243 = vmul.f32 %v163, %v163
    %v244 = vadd.f32 %v228, 1e-06
    %v245 = vadd.f32 %v229, 1e-06
    %v246 = vadd.f32 %v230, 1e-06
    %v247 = vadd.f32 %v231, 1e-06
    %v248 = vadd.f32 %v232, 1e-06
    %v249 = vadd.f32 %v233, 1e-06
    %v250 = vadd.f32 %v234, 1e-06
    %v251 = vadd.f32 %v235, 1e-06
    %v252 = vadd.f32 %v236, 1e-06
    %v253 = vadd.f32 %v237, 1e-06
    %v254 = vadd.f32 %v238, 1e-06
    %v255 = vadd.f32 %v239, 1e-06
    %v256 = vadd.f32 %v240, 1e-06
    %v257 = vadd.f32 %v241, 1e-06
    %v258 = vadd.f32 %v242, 1e-06
    %v259 = vadd.f32 %v243, 1e-06
    %v260 = vrsqrt.pop %v244
    %v261 = vmul.f32 %v244, %v260
    %vm262 = vcmp.eq.f32.partialorder %v244, inf
    %v263 = vsel %vm262, %v244, %v261
    %vm264 = vcmp.eq.f32.partialorder %v244, 0.0
    %v265 = vand.u32 %v244, 2147483648
    %v266 = vsel %vm264, %v265, %v263
    %v267 = vrsqrt.pop %v245
    %v268 = vmul.f32 %v245, %v267
    %vm269 = vcmp.eq.f32.partialorder %v245, inf
    %v270 = vsel %vm269, %v245, %v268
    %vm271 = vcmp.eq.f32.partialorder %v245, 0.0
    %v272 = vand.u32 %v245, 2147483648
    %v273 = vsel %vm271, %v272, %v270
    %v274 = vrsqrt.pop %v246
    %v275 = vmul.f32 %v246, %v274
    %vm276 = vcmp.eq.f32.partialorder %v246, inf
    %v277 = vsel %vm276, %v246, %v275
    %vm278 = vcmp.eq.f32.partialorder %v246, 0.0
    %v279 = vand.u32 %v246, 2147483648
    %v280 = vsel %vm278, %v279, %v277
    %v281 = vrsqrt.pop %v247
    %v282 = vmul.f32 %v247, %v281
    %vm283 = vcmp.eq.f32.partialorder %v247, inf
    %v284 = vsel %vm283, %v247, %v282
    %vm285 = vcmp.eq.f32.partialorder %v247, 0.0
    %v286 = vand.u32 %v247, 2147483648
    %v287 = vsel %vm285, %v286, %v284
    %v288 = vrsqrt.pop %v248
    %v289 = vmul.f32 %v248, %v288
    %vm290 = vcmp.eq.f32.partialorder %v248, inf
    %v291 = vsel %vm290, %v248, %v289
    %vm292 = vcmp.eq.f32.partialorder %v248, 0.0
    %v293 = vand.u32 %v248, 2147483648
    %v294 = vsel %vm292, %v293, %v291
    %v295 = vrsqrt.pop %v249
    %v296 = vmul.f32 %v249, %v295
    %vm297 = vcmp.eq.f32.partialorder %v249, inf
    %v298 = vsel %vm297, %v249, %v296
    %vm299 = vcmp.eq.f32.partialorder %v249, 0.0
    %v300 = vand.u32 %v249, 2147483648
    %v301 = vsel %vm299, %v300, %v298
    %v302 = vrsqrt.pop %v250
    %v303 = vmul.f32 %v250, %v302
    %vm304 = vcmp.eq.f32.partialorder %v250, inf
    %v305 = vsel %vm304, %v250, %v303
    %vm306 = vcmp.eq.f32.partialorder %v250, 0.0
    %v307 = vand.u32 %v250, 2147483648
    %v308 = vsel %vm306, %v307, %v305
    %v309 = vrsqrt.pop %v251
    %v310 = vmul.f32 %v251, %v309
    %vm311 = vcmp.eq.f32.partialorder %v251, inf
    %v312 = vsel %vm311, %v251, %v310
    %vm313 = vcmp.eq.f32.partialorder %v251, 0.0
    %v314 = vand.u32 %v251, 2147483648
    %v315 = vsel %vm313, %v314, %v312
    %v316 = vrsqrt.pop %v252
    %v317 = vmul.f32 %v252, %v316
    %vm318 = vcmp.eq.f32.partialorder %v252, inf
    %v319 = vsel %vm318, %v252, %v317
    %vm320 = vcmp.eq.f32.partialorder %v252, 0.0
    %v321 = vand.u32 %v252, 2147483648
    %v322 = vsel %vm320, %v321, %v319
    %v323 = vrsqrt.pop %v253
    %v324 = vmul.f32 %v253, %v323
    %vm325 = vcmp.eq.f32.partialorder %v253, inf
    %v326 = vsel %vm325, %v253, %v324
    %vm327 = vcmp.eq.f32.partialorder %v253, 0.0
    %v328 = vand.u32 %v253, 2147483648
    %v329 = vsel %vm327, %v328, %v326
    %v330 = vrsqrt.pop %v254
    %v331 = vmul.f32 %v254, %v330
    %vm332 = vcmp.eq.f32.partialorder %v254, inf
    %v333 = vsel %vm332, %v254, %v331
    %vm334 = vcmp.eq.f32.partialorder %v254, 0.0
    %v335 = vand.u32 %v254, 2147483648
    %v336 = vsel %vm334, %v335, %v333
    %v337 = vrsqrt.pop %v255
    %v338 = vmul.f32 %v255, %v337
    %vm339 = vcmp.eq.f32.partialorder %v255, inf
    %v340 = vsel %vm339, %v255, %v338
    %vm341 = vcmp.eq.f32.partialorder %v255, 0.0
    %v342 = vand.u32 %v255, 2147483648
    %v343 = vsel %vm341, %v342, %v340
    %v344 = vrsqrt.pop %v256
    %v345 = vmul.f32 %v256, %v344
    %vm346 = vcmp.eq.f32.partialorder %v256, inf
    %v347 = vsel %vm346, %v256, %v345
    %vm348 = vcmp.eq.f32.partialorder %v256, 0.0
    %v349 = vand.u32 %v256, 2147483648
    %v350 = vsel %vm348, %v349, %v347
    %v351 = vrsqrt.pop %v257
    %v352 = vmul.f32 %v257, %v351
    %vm353 = vcmp.eq.f32.partialorder %v257, inf
    %v354 = vsel %vm353, %v257, %v352
    %vm355 = vcmp.eq.f32.partialorder %v257, 0.0
    %v356 = vand.u32 %v257, 2147483648
    %v357 = vsel %vm355, %v356, %v354
    %v358 = vrsqrt.pop %v258
    %v359 = vmul.f32 %v258, %v358
    %vm360 = vcmp.eq.f32.partialorder %v258, inf
    %v361 = vsel %vm360, %v258, %v359
    %vm362 = vcmp.eq.f32.partialorder %v258, 0.0
    %v363 = vand.u32 %v258, 2147483648
    %v364 = vsel %vm362, %v363, %v361
    %v365 = vrsqrt.pop %v259
    %v366 = vmul.f32 %v259, %v365
    %vm367 = vcmp.eq.f32.partialorder %v259, inf
    %v368 = vsel %vm367, %v259, %v366
    %vm369 = vcmp.eq.f32.partialorder %v259, 0.0
    %v370 = vand.u32 %v259, 2147483648
    %v371 = vsel %vm369, %v370, %v368
    %vm388 = vcmask 1046528
    %v389 = vrot.slane %v266, 1
    %v390 = vrot.slane %v273, 1
    %v391 = vsel %vm388, %v389, %v390
    %v392 = vrot.slane %v280, 1
    %v393 = vrot.slane %v287, 1
    %v394 = vsel %vm388, %v392, %v393
    %v395 = vrot.slane %v294, 1
    %v396 = vrot.slane %v301, 1
    %v397 = vsel %vm388, %v395, %v396
    %v398 = vrot.slane %v308, 1
    %v399 = vrot.slane %v315, 1
    %v400 = vsel %vm388, %v398, %v399
    %v401 = vrot.slane %v322, 1
    %v402 = vrot.slane %v329, 1
    %v403 = vsel %vm388, %v401, %v402
    %v404 = vrot.slane %v336, 1
    %v405 = vrot.slane %v343, 1
    %v406 = vsel %vm388, %v404, %v405
    %v407 = vrot.slane %v350, 1
    %v408 = vrot.slane %v357, 1
    %v409 = vsel %vm388, %v407, %v408
    %v410 = vrot.slane %v364, 1
    %v411 = vrot.slane %v371, 1
    %v412 = vsel %vm388, %v410, %v411
    %vm429 = vcmask 130048
    %v430 = vsel %vm429, %v391, 0.0
    %vm431 = vcmask 129024
    %v432 = vsel %vm431, %v390, 0.0
    %v433 = vadd.f32 %v430, %v432
    %v434 = vsel %vm429, %v394, 0.0
    %v435 = vadd.f32 %v433, %v434
    %v436 = vsel %vm431, %v393, 0.0
    %v437 = vadd.f32 %v435, %v436
    %v438 = vsel %vm429, %v397, 0.0
    %v439 = vadd.f32 %v437, %v438
    %v440 = vsel %vm431, %v396, 0.0
    %v441 = vadd.f32 %v439, %v440
    %v442 = vsel %vm429, %v400, 0.0
    %v443 = vadd.f32 %v441, %v442
    %v444 = vsel %vm431, %v399, 0.0
    %v445 = vadd.f32 %v443, %v444
    %v446 = vsel %vm429, %v403, 0.0
    %v447 = vadd.f32 %v445, %v446
    %v448 = vsel %vm431, %v402, 0.0
    %v449 = vadd.f32 %v447, %v448
    %v450 = vsel %vm429, %v406, 0.0
    %v451 = vadd.f32 %v449, %v450
    %v452 = vsel %vm431, %v405, 0.0
    %v453 = vadd.f32 %v451, %v452
    %v454 = vsel %vm429, %v409, 0.0
    %v455 = vadd.f32 %v453, %v454
    %v456 = vsel %vm431, %v408, 0.0
    %v457 = vadd.f32 %v455, %v456
    %v458 = vsel %vm429, %v412, 0.0
    %v459 = vadd.f32 %v457, %v458
    %v460 = vsel %vm431, %v411, 0.0
    %v461 = vadd.f32 %v459, %v460
    %462 = vadd.xlane.f32.xlu0 %v461
    %v463 = vpop.xlane.xlu0 %462
    %v464 = vrot.slane %v463, 4
    %v465 = vadd.f32 %v463, %v464
    %v466 = vrot.slane %v465, 2
    %v467 = vadd.f32 %v465, %v466
    %v468 = vrot.slane %v467, 1
    %v469 = vadd.f32 %v467, %v468
    %s470 = vtos %v469
    %v471 = vmul.f32 %v212, %v212
    %v472 = vmul.f32 %v213, %v213
    %v473 = vmul.f32 %v214, %v214
    %v474 = vmul.f32 %v215, %v215
    %v475 = vmul.f32 %v216, %v216
    %v476 = vmul.f32 %v217, %v217
    %v477 = vmul.f32 %v218, %v218
    %v478 = vmul.f32 %v219, %v219
    %v479 = vmul.f32 %v220, %v220
    %v480 = vmul.f32 %v221, %v221
    %v481 = vmul.f32 %v222, %v222
    %v482 = vmul.f32 %v223, %v223
    %v483 = vmul.f32 %v224, %v224
    %v484 = vmul.f32 %v225, %v225
    %v485 = vmul.f32 %v226, %v226
    %v486 = vmul.f32 %v227, %v227
    %v487 = vadd.f32 %v471, 1e-06
    %v488 = vadd.f32 %v472, 1e-06
    %v489 = vadd.f32 %v473, 1e-06
    %v490 = vadd.f32 %v474, 1e-06
    %v491 = vadd.f32 %v475, 1e-06
    %v492 = vadd.f32 %v476, 1e-06
    %v493 = vadd.f32 %v477, 1e-06
    %v494 = vadd.f32 %v478, 1e-06
    %v495 = vadd.f32 %v479, 1e-06
    %v496 = vadd.f32 %v480, 1e-06
    %v497 = vadd.f32 %v481, 1e-06
    %v498 = vadd.f32 %v482, 1e-06
    %v499 = vadd.f32 %v483, 1e-06
    %v500 = vadd.f32 %v484, 1e-06
    %v501 = vadd.f32 %v485, 1e-06
    %v502 = vadd.f32 %v486, 1e-06
    %v503 = vrsqrt.pop %v487
    %v504 = vmul.f32 %v487, %v503
    %vm505 = vcmp.eq.f32.partialorder %v487, inf
    %v506 = vsel %vm505, %v487, %v504
    %vm507 = vcmp.eq.f32.partialorder %v487, 0.0
    %v508 = vand.u32 %v487, 2147483648
    %v509 = vsel %vm507, %v508, %v506
    %v510 = vrsqrt.pop %v488
    %v511 = vmul.f32 %v488, %v510
    %vm512 = vcmp.eq.f32.partialorder %v488, inf
    %v513 = vsel %vm512, %v488, %v511
    %vm514 = vcmp.eq.f32.partialorder %v488, 0.0
    %v515 = vand.u32 %v488, 2147483648
    %v516 = vsel %vm514, %v515, %v513
    %v517 = vrsqrt.pop %v489
    %v518 = vmul.f32 %v489, %v517
    %vm519 = vcmp.eq.f32.partialorder %v489, inf
    %v520 = vsel %vm519, %v489, %v518
    %vm521 = vcmp.eq.f32.partialorder %v489, 0.0
    %v522 = vand.u32 %v489, 2147483648
    %v523 = vsel %vm521, %v522, %v520
    %v524 = vrsqrt.pop %v490
    %v525 = vmul.f32 %v490, %v524
    %vm526 = vcmp.eq.f32.partialorder %v490, inf
    %v527 = vsel %vm526, %v490, %v525
    %vm528 = vcmp.eq.f32.partialorder %v490, 0.0
    %v529 = vand.u32 %v490, 2147483648
    %v530 = vsel %vm528, %v529, %v527
    %v531 = vrsqrt.pop %v491
    %v532 = vmul.f32 %v491, %v531
    %vm533 = vcmp.eq.f32.partialorder %v491, inf
    %v534 = vsel %vm533, %v491, %v532
    %vm535 = vcmp.eq.f32.partialorder %v491, 0.0
    %v536 = vand.u32 %v491, 2147483648
    %v537 = vsel %vm535, %v536, %v534
    %v538 = vrsqrt.pop %v492
    %v539 = vmul.f32 %v492, %v538
    %vm540 = vcmp.eq.f32.partialorder %v492, inf
    %v541 = vsel %vm540, %v492, %v539
    %vm542 = vcmp.eq.f32.partialorder %v492, 0.0
    %v543 = vand.u32 %v492, 2147483648
    %v544 = vsel %vm542, %v543, %v541
    %v545 = vrsqrt.pop %v493
    %v546 = vmul.f32 %v493, %v545
    %vm547 = vcmp.eq.f32.partialorder %v493, inf
    %v548 = vsel %vm547, %v493, %v546
    %vm549 = vcmp.eq.f32.partialorder %v493, 0.0
    %v550 = vand.u32 %v493, 2147483648
    %v551 = vsel %vm549, %v550, %v548
    %v552 = vrsqrt.pop %v494
    %v553 = vmul.f32 %v494, %v552
    %vm554 = vcmp.eq.f32.partialorder %v494, inf
    %v555 = vsel %vm554, %v494, %v553
    %vm556 = vcmp.eq.f32.partialorder %v494, 0.0
    %v557 = vand.u32 %v494, 2147483648
    %v558 = vsel %vm556, %v557, %v555
    %v559 = vrsqrt.pop %v495
    %v560 = vmul.f32 %v495, %v559
    %vm561 = vcmp.eq.f32.partialorder %v495, inf
    %v562 = vsel %vm561, %v495, %v560
    %vm563 = vcmp.eq.f32.partialorder %v495, 0.0
    %v564 = vand.u32 %v495, 2147483648
    %v565 = vsel %vm563, %v564, %v562
    %v566 = vrsqrt.pop %v496
    %v567 = vmul.f32 %v496, %v566
    %vm568 = vcmp.eq.f32.partialorder %v496, inf
    %v569 = vsel %vm568, %v496, %v567
    %vm570 = vcmp.eq.f32.partialorder %v496, 0.0
    %v571 = vand.u32 %v496, 2147483648
    %v572 = vsel %vm570, %v571, %v569
    %v573 = vrsqrt.pop %v497
    %v574 = vmul.f32 %v497, %v573
    %vm575 = vcmp.eq.f32.partialorder %v497, inf
    %v576 = vsel %vm575, %v497, %v574
    %vm577 = vcmp.eq.f32.partialorder %v497, 0.0
    %v578 = vand.u32 %v497, 2147483648
    %v579 = vsel %vm577, %v578, %v576
    %v580 = vrsqrt.pop %v498
    %v581 = vmul.f32 %v498, %v580
    %vm582 = vcmp.eq.f32.partialorder %v498, inf
    %v583 = vsel %vm582, %v498, %v581
    %vm584 = vcmp.eq.f32.partialorder %v498, 0.0
    %v585 = vand.u32 %v498, 2147483648
    %v586 = vsel %vm584, %v585, %v583
    %v587 = vrsqrt.pop %v499
    %v588 = vmul.f32 %v499, %v587
    %vm589 = vcmp.eq.f32.partialorder %v499, inf
    %v590 = vsel %vm589, %v499, %v588
    %vm591 = vcmp.eq.f32.partialorder %v499, 0.0
    %v592 = vand.u32 %v499, 2147483648
    %v593 = vsel %vm591, %v592, %v590
    %v594 = vrsqrt.pop %v500
    %v595 = vmul.f32 %v500, %v594
    %vm596 = vcmp.eq.f32.partialorder %v500, inf
    %v597 = vsel %vm596, %v500, %v595
    %vm598 = vcmp.eq.f32.partialorder %v500, 0.0
    %v599 = vand.u32 %v500, 2147483648
    %v600 = vsel %vm598, %v599, %v597
    %v601 = vrsqrt.pop %v501
    %v602 = vmul.f32 %v501, %v601
    %vm603 = vcmp.eq.f32.partialorder %v501, inf
    %v604 = vsel %vm603, %v501, %v602
    %vm605 = vcmp.eq.f32.partialorder %v501, 0.0
    %v606 = vand.u32 %v501, 2147483648
    %v607 = vsel %vm605, %v606, %v604
    %v608 = vrsqrt.pop %v502
    %v609 = vmul.f32 %v502, %v608
    %vm610 = vcmp.eq.f32.partialorder %v502, inf
    %v611 = vsel %vm610, %v502, %v609
    %vm612 = vcmp.eq.f32.partialorder %v502, 0.0
    %v613 = vand.u32 %v502, 2147483648
    %v614 = vsel %vm612, %v613, %v611
    %631 = vrot.lane.b32.xlu0 %v509, 127
    %v632 = vpop.permute.xlu0 %631
    %633 = vrot.lane.b32.xlu0 %v516, 127
    %v634 = vpop.permute.xlu0 %633
    %635 = vrot.lane.b32.xlu0 %v523, 127
    %v636 = vpop.permute.xlu0 %635
    %637 = vrot.lane.b32.xlu0 %v530, 127
    %v638 = vpop.permute.xlu0 %637
    %639 = vrot.lane.b32.xlu0 %v537, 127
    %v640 = vpop.permute.xlu0 %639
    %641 = vrot.lane.b32.xlu0 %v544, 127
    %v642 = vpop.permute.xlu0 %641
    %643 = vrot.lane.b32.xlu0 %v551, 127
    %v644 = vpop.permute.xlu0 %643
    %645 = vrot.lane.b32.xlu0 %v558, 127
    %v646 = vpop.permute.xlu0 %645
    %647 = vrot.lane.b32.xlu0 %v565, 127
    %v648 = vpop.permute.xlu0 %647
    %649 = vrot.lane.b32.xlu0 %v572, 127
    %v650 = vpop.permute.xlu0 %649
    %651 = vrot.lane.b32.xlu0 %v579, 127
    %v652 = vpop.permute.xlu0 %651
    %653 = vrot.lane.b32.xlu0 %v586, 127
    %v654 = vpop.permute.xlu0 %653
    %655 = vrot.lane.b32.xlu0 %v593, 127
    %v656 = vpop.permute.xlu0 %655
    %657 = vrot.lane.b32.xlu0 %v600, 127
    %v658 = vpop.permute.xlu0 %657
    %659 = vrot.lane.b32.xlu0 %v607, 127
    %v660 = vpop.permute.xlu0 %659
    %661 = vrot.lane.b32.xlu0 %v614, 127
    %v662 = vpop.permute.xlu0 %661
    %vm679 = vcmask 121856
    %v680 = vsel %vm679, %v632, 0.0
    %v681 = vsel %vm679, %v634, 0.0
    %v682 = vadd.f32 %v680, %v681
    %v683 = vsel %vm679, %v636, 0.0
    %v684 = vadd.f32 %v682, %v683
    %v685 = vsel %vm679, %v638, 0.0
    %v686 = vadd.f32 %v684, %v685
    %v687 = vsel %vm679, %v640, 0.0
    %v688 = vadd.f32 %v686, %v687
    %v689 = vsel %vm679, %v642, 0.0
    %v690 = vadd.f32 %v688, %v689
    %v691 = vsel %vm679, %v644, 0.0
    %v692 = vadd.f32 %v690, %v691
    %v693 = vsel %vm679, %v646, 0.0
    %v694 = vadd.f32 %v692, %v693
    %v695 = vsel %vm679, %v648, 0.0
    %v696 = vadd.f32 %v694, %v695
    %v697 = vsel %vm679, %v650, 0.0
    %v698 = vadd.f32 %v696, %v697
    %v699 = vsel %vm679, %v652, 0.0
    %v700 = vadd.f32 %v698, %v699
    %v701 = vsel %vm679, %v654, 0.0
    %v702 = vadd.f32 %v700, %v701
    %v703 = vsel %vm679, %v656, 0.0
    %v704 = vadd.f32 %v702, %v703
    %v705 = vsel %vm679, %v658, 0.0
    %v706 = vadd.f32 %v704, %v705
    %v707 = vsel %vm679, %v660, 0.0
    %v708 = vadd.f32 %v706, %v707
    %v709 = vsel %vm679, %v662, 0.0
    %v710 = vadd.f32 %v708, %v709
    %711 = vadd.xlane.f32.xlu0 %v710
    %v712 = vpop.xlane.xlu0 %711
    %v713 = vrot.slane %v712, 4
    %v714 = vadd.f32 %v712, %v713
    %v715 = vrot.slane %v714, 2
    %v716 = vadd.f32 %v714, %v715
    %v717 = vrot.slane %v716, 1
    %v718 = vadd.f32 %v716, %v717
    %s719 = vtos %v718
    %v720 = vstv %s470
    %721 = vst [vmem:[#allocation7] sm:$0xff] %v720
    %v722 = vstv %s719
    %723 = vst [vmem:[#allocation8] sm:$0xff] %v722
    // Predicated region
    $region18: #{tpu_custom_call.1} parent=1 // pred_check
      _
    $region19: #{tpu_custom_call.1} parent=1 // pred_check_branch
      %725 = sbr.rel (0) target = $region21
    $region20: #{tpu_custom_call.1} parent=1 // pred_region
      %s727 = ssub.s32 128, 128
      %728 = vsyncadd [#allocation4], %s727
      %s730 = sshll.u32 [#allocation7], 4
      %s731 = int_to_ptr.vmem [resolvable:$true] %s730
      %733 = dma.vmem_to_hbm [thread:$0]  %s731, 128, %s2, [#allocation4]
    $region21: #{tpu_custom_call.1} parent=1 // pred_fallthru
      _
    // Predicated region
    $region22: #{tpu_custom_call.1} parent=1 // pred_check
      _
    $region23: #{tpu_custom_call.1} parent=1 // pred_check_branch
      %735 = sbr.rel (0) target = $region25
    $region24: #{tpu_custom_call.1} parent=1 // pred_region
      %s737 = ssub.s32 128, 128
      %738 = vsyncadd [#allocation9], %s737
      %s740 = sshll.u32 [#allocation8], 4
      %s741 = int_to_ptr.vmem [resolvable:$true] %s740
      %743 = dma.vmem_to_hbm [thread:$0]  %s741, 128, %s3, [#allocation9]
    $region25: #{tpu_custom_call.1} parent=1 // pred_fallthru
      _
    // Predicated region
    $region26: #{tpu_custom_call.1} parent=1 // pred_check
      _
    $region27: #{tpu_custom_call.1} parent=1 // pred_check_branch
      %745 = sbr.rel (0) target = $region29
    $region28: #{tpu_custom_call.1} parent=1 // pred_region
      %746 = dma.done [#allocation4], 128
    $region29: #{tpu_custom_call.1} parent=1 // pred_fallthru
      _
    // Predicated region
    $region30: #{tpu_custom_call.1} parent=1 // pred_check
      _
    $region31: #{tpu_custom_call.1} parent=1 // pred_check_branch
      %748 = sbr.rel (0) target = $region33
    $region32: #{tpu_custom_call.1} parent=1 // pred_region
      %749 = dma.done [#allocation9], 128
    $region33: #{tpu_custom_call.1} parent=1 // pred_fallthru
      _
    %750 = vsyncpa [#allocation3], 1
    %751 = vsyncpa [#allocation6], 1
    %752 = vsyncpa [#allocation4], 1
    %753 = vsyncpa [#allocation9], 1

</llo_original>
